<compile_context>
chip_gen: v6e
topology: v6e:2x2x1
jax: 0.10.0
libtpu: 0.0.40
codegen_flags: <defaults>
</compile_context>

<pallas_src>
import functools
import math

import jax
import jax.numpy as jnp
from jax.experimental import pallas as pl
from jax.experimental.pallas import tpu as pltpu

LANES = 128
SUBLANES = 8
MAX_ROW_TILE = 2048  # 2048 * 128 * 4 B = 1 MiB per f32 buffer


def _round_up(x, m):
    return ((x + m - 1) // m) * m


def _ssp_kernel(x_ref, o_ref, *, beta, threshold, sp0):
    x = x_ref[...]
    xf = x.astype(jnp.float32)
    bx = xf if beta == 1.0 else beta * xf
    # Stable softplus: max(bx, 0) + log1p(exp(-|bx|))  (no overflow for any bx).
    sp = jnp.maximum(bx, 0.0) + jnp.log1p(jnp.exp(-jnp.abs(bx)))
    if beta != 1.0:
        sp = sp / beta
    # PyTorch reverts to the identity above the threshold.
    sp = jnp.where(bx > threshold, xf, sp)
    o_ref[...] = (sp - sp0).astype(o_ref.dtype)


def ssp(x, beta=1.0, threshold=20.0):
    """Shifted SoftPlus, elementwise; same shape/dtype as the input."""
    beta = float(beta)
    threshold = float(threshold)
    orig_shape = x.shape
    orig_dtype = x.dtype

    n = math.prod(orig_shape) if orig_shape else 1
    if n == 0:
        return x

    # softplus(0): 0 only hits the linear branch when threshold < 0.
    sp0 = 0.0 if threshold < 0.0 else math.log(2.0) / beta

    flat = x.reshape(-1)

    # Pad only to vreg (8 x 128) granularity; skip entirely when aligned.
    tile_elems = SUBLANES * LANES  # 1024
    n_pad = _round_up(n, tile_elems)
    padded = n_pad != n
    if padded:
        flat = jnp.concatenate(
            [flat, jnp.zeros((n_pad - n,), dtype=orig_dtype)], axis=0
        )

    rows = n_pad // LANES
    x2d = flat.reshape(rows, LANES)

    # Big tile for throughput, but keep >= 2 grid steps for medium inputs so
    # v7x can shard the "parallel" axis across both TensorCores.
    row_tile = min(MAX_ROW_TILE, _round_up(pl.cdiv(rows, 2), SUBLANES))
    row_tile = max(row_tile, SUBLANES)
    grid = (pl.cdiv(rows, row_tile),)

    kernel = functools.partial(
        _ssp_kernel, beta=beta, threshold=threshold, sp0=sp0
    )

    out2d = pl.pallas_call(
        kernel,
        out_shape=jax.ShapeDtypeStruct((rows, LANES), orig_dtype),
        grid=grid,
        in_specs=[pl.BlockSpec((row_tile, LANES), lambda i: (i, 0))],
        out_specs=pl.BlockSpec((row_tile, LANES), lambda i: (i, 0)),
        compiler_params=pltpu.CompilerParams(
            dimension_semantics=("parallel",)
        ),
    )(x2d)

    out_flat = out2d.reshape(-1)
    if padded:
        out_flat = out_flat[:n]
    return out_flat.reshape(orig_shape)


def _ssp_ref(x, beta=1.0, threshold=20.0):
    xf = x.astype(jnp.float32)
    bx = beta * xf
    sp = (jnp.maximum(bx, 0.0) + jnp.log1p(jnp.exp(-jnp.abs(bx)))) / beta
    sp = jnp.where(bx > threshold, xf, sp)
    sp0 = 0.0 if threshold < 0.0 else math.log(2.0) / beta
    return (sp - sp0).astype(x.dtype)


if __name__ == "__main__":
    key = jax.random.PRNGKey(0)
    k1, k2 = jax.random.split(key)

    # Case 1: (N, *) input, aligned size -> no pad / no slice path.
    x1 = jax.random.normal(k1, (2, 4, 16, 16), dtype=jnp.float32) * 5.0
    out1 = jax.block_until_ready(ssp(x1, beta=1.0, threshold=20.0))
    ref1 = _ssp_ref(x1, beta=1.0, threshold=20.0)
    assert out1.shape == x1.shape and out1.dtype == x1.dtype
    assert jnp.max(jnp.abs(out1 - ref1)) < 1e-5

    # Case 2: ragged size + non-default beta/threshold -> exercises pad path.
    x2 = jax.random.normal(k2, (3, 5, 7), dtype=jnp.float32) * 10.0
    out2 = jax.block_until_ready(ssp(x2, beta=1.5, threshold=10.0))
    ref2 = _ssp_ref(x2, beta=1.5, threshold=10.0)
    assert out2.shape == x2.shape and out2.dtype == x2.dtype
    assert jnp.max(jnp.abs(out2 - ref2)) < 1e-5

    print("KERNEL_OK")
</pallas_src>

<mosaic_0001>
module attributes {stable_mosaic.version = 11 : i64} {
  func.func @_ssp_kernel(%arg0: i32, %arg1: memref<8x128xf32, #tpu.memory_space<vmem>>, %arg2: memref<8x128xf32, #tpu.memory_space<vmem>>) attributes {dimension_semantics = [#tpu.dimension_semantics<parallel>], iteration_bounds = array<i64: 2>, scalar_prefetch = 0 : i64, scratch_operands = 0 : i64, tpu.core_type = #tpu.core_type<tc>, window_params = [{transform_indices = @transform_0, window_bounds = array<i64: 8, 128>}, {transform_indices = @transform_1, window_bounds = array<i64: 8, 128>}]} {
    %c0 = arith.constant 0 : index
    %c0_0 = arith.constant 0 : index
    %0 = vector.load %arg1[%c0, %c0_0] : memref<8x128xf32, #tpu.memory_space<vmem>>, vector<8x128xf32>
    %cst = arith.constant 0.000000e+00 : f32
    %1 = vector.broadcast %cst : f32 to vector<8x128xf32>
    %2 = arith.maximumf %0, %1 : vector<8x128xf32>
    %3 = math.absf %0 : vector<8x128xf32>
    %cst_1 = arith.constant 0.000000e+00 : f32
    %4 = vector.broadcast %cst_1 : f32 to vector<8x128xf32>
    %5 = arith.subf %4, %3 : vector<8x128xf32>
    %6 = math.exp %5 : vector<8x128xf32>
    %7 = math.log1p %6 : vector<8x128xf32>
    %8 = arith.addf %2, %7 : vector<8x128xf32>
    %cst_2 = arith.constant 2.000000e+01 : f32
    %9 = vector.broadcast %cst_2 : f32 to vector<8x128xf32>
    %10 = arith.cmpf ogt, %0, %9 : vector<8x128xf32>
    %11 = arith.select %10, %0, %8 : vector<8x128xi1>, vector<8x128xf32>
    %cst_3 = arith.constant 0.693147182 : f32
    %12 = vector.broadcast %cst_3 : f32 to vector<8x128xf32>
    %13 = arith.subf %11, %12 : vector<8x128xf32>
    %c0_4 = arith.constant 0 : index
    %c0_5 = arith.constant 0 : index
    %14 = vector.load %arg2[%c0_4, %c0_5] : memref<8x128xf32, #tpu.memory_space<vmem>>, vector<8x128xf32>
    tpu.vector_store %arg2[%c0_4, %c0_5], %13 {strides = array<i32>} : memref<8x128xf32, #tpu.memory_space<vmem>>, vector<8x128xf32>,
    return
  }
  func.func @transform_0(%arg0: i32) -> (i32, i32) {
    %c0_i32 = arith.constant 0 : i32
    %c0_i32_0 = arith.constant 0 : i32
    return %arg0, %c0_i32 : i32, i32
  }
  func.func @transform_1(%arg0: i32) -> (i32, i32) {
    %c0_i32 = arith.constant 0 : i32
    %c0_i32_0 = arith.constant 0 : i32
    return %arg0, %c0_i32 : i32, i32
  }
}

</mosaic_0001>

<llo_original>
// kernel: tpu_custom_call.1
$region0: #{tpu_custom_call.1}
  #allocation0 [shape = 'u32[]', space=smem, size = 0x4, offset = 0x4, fixed_abs, tag = 'smem constant byte address 0x4 - core index']
  #allocation1 [shape = 'u32[144,128]{1,0:T(1,128)}', space=vmem, size = 0x12000, scoped, tag = 'internal scratch']
  %s0 = inlined_call_operand.hbm [shape: f32[16,128], index: 0, kind: input, shape index: {}]
  %s1 = inlined_call_operand.hbm [shape: f32[16,128], index: 1, kind: output, shape index: {}]
  %s2 = sld [smem:[#allocation0]]
  $region41: #{tpu_custom_call.1} parent=0
    _
  %s4 = ssub.s32 1, %s2
  %s5 = scalar_select 0, %s4, %s2
  $region1: #{tpu_custom_call.1} parent=0
    #allocation2 [shape = 'u8[8192]{0}', space=vmem, size = 0x2000, scoped, tag = 'input window, operand 0']
    #allocation3 [shape = 's32[2]{0}', space=sflag, size = 0x8, scoped, tag = 'scoped memory for tpu_custom_call.1']
    #allocation4 [shape = 's32[2]{0}', space=sflag, size = 0x8, scoped, tag = 'scoped memory for tpu_custom_call.1']
    #allocation5 [shape = 'u8[8192]{0}', space=vmem, size = 0x2000, scoped, tag = 'output window, operand 0']
    %6 = vsyncpa [#allocation3], 0
    %s7 = scalar_lea.sflag [#allocation3], 1
    %8 = vsyncpa %s7, 0
    %9 = vsyncpa [#allocation4], 0
    %s10 = scalar_lea.sflag [#allocation4], 1
    %11 = vsyncpa %s10, 0
    loop: start=0, step=1, limit=4
    $region2: #{tpu_custom_call.1} parent=1 // loop_pre_header
      _
    $region3: #{tpu_custom_call.1} parent=1 // loop_header
      %s13 = sphi 0, %s17
      %p14 = scmp.ge.s32.totalorder %s13, 4
      %s23 = sphi 0, %s25
      %s26 = sphi 0, %s23
      %s27 = sphi 0, %s26
      %s43 = sphi 0, %s27
      %s49 = sphi 0, %s51
      %s52 = sphi 0, %s49
      %s53 = sphi 0, %s52
      %s69 = sphi 0, %s53
    $region4: #{tpu_custom_call.1} parent=1 // loop_header_branch
      %16 = sbr.rel (%p14) target = $region8
    $region5: #{tpu_custom_call.1} parent=1 // loop_body
      %s18 = ssub.s32 %s13, 1
      %s19 = ssub.s32 %s13, 2
      %s20 = sadd.s32 %s13, 1
      %s21 = ssub.s32 %s13, %s20
      %p22 = scmp.eq.s32.totalorder %s21, 0
      %s24 = sadd.s32 %s23, 1
      %s25 = scalar_select %p22, %s23, %s24
      %p28 = pneg %p22
      %p29 = scmp.eq.s32.totalorder %s13, 1
      %p30 = por %p28, %p29
      %p31 = scmp.ne.s32.totalorder %s23, %s26
      %p32 = scmp.eq.s32.totalorder %s13, 0
      %p33 = por %p31, %p32
      %p34 = scmp.ne.s32.totalorder %s23, %s26
      %p35 = scmp.eq.s32.totalorder %s18, 1
      %p36 = por %p34, %p35
      %p37 = scmp.ne.s32.totalorder %s26, %s27
      %p38 = scmp.eq.s32.totalorder %s18, 0
      %p39 = por %p37, %p38
      %p40 = scmp.ne.s32.totalorder %s26, %s27
      %p41 = scmp.eq.s32.totalorder %s19, 1
      %p42 = por %p40, %p41
      %p44 = scmp.ne.s32.totalorder %s27, %s43
      %p45 = scmp.eq.s32.totalorder %s19, 0
      %p46 = por %p44, %p45
      %s47 = ssub.s32 %s13, %s20
      %p48 = scmp.eq.s32.totalorder %s47, 0
      %s50 = sadd.s32 %s49, 1
      %s51 = scalar_select %p48, %s49, %s50
      %p54 = pneg %p48
      %p55 = scmp.eq.s32.totalorder %s13, 1
      %p56 = por %p54, %p55
      %p57 = scmp.ne.s32.totalorder %s49, %s52
      %p58 = scmp.eq.s32.totalorder %s13, 0
      %p59 = por %p57, %p58
      %p60 = scmp.ne.s32.totalorder %s49, %s52
      %p61 = scmp.eq.s32.totalorder %s18, 1
      %p62 = por %p60, %p61
      %p63 = scmp.ne.s32.totalorder %s52, %s53
      %p64 = scmp.eq.s32.totalorder %s18, 0
      %p65 = por %p63, %p64
      %p66 = scmp.ne.s32.totalorder %s52, %s53
      %p67 = scmp.eq.s32.totalorder %s19, 1
      %p68 = por %p66, %p67
      %p70 = scmp.ne.s32.totalorder %s53, %s69
      %p71 = scmp.eq.s32.totalorder %s19, 0
      %p72 = por %p70, %p71
      %p73 = scmp.le.s32.totalorder 1, %s13
      %p74 = scmp.lt.s32.totalorder %s13, 3
      %p75 = pnand %p73, %p74
      %p76 = pneg %p75
      // Predicated region
      $region9: #{tpu_custom_call.1} parent=5 // pred_check
        _
      $region10: #{tpu_custom_call.1} parent=5 // pred_check_branch
        %78 = sbr.rel (%p75) target = $region12
      $region11: #{tpu_custom_call.1} parent=5 // pred_region
        %s79 = ssub.s32 %s13, 1
      $region12: #{tpu_custom_call.1} parent=5 // pred_fallthru
        _
      %p80 = scmp.lt.s32.totalorder %s13, 2
      // Predicated region
      $region13: #{tpu_custom_call.1} parent=5 // pred_check
        %p81 = pneg %p80
      $region14: #{tpu_custom_call.1} parent=5 // pred_check_branch
        %83 = sbr.rel (%p81) target = $region16
      $region15: #{tpu_custom_call.1} parent=5 // pred_region
        // Predicated region
        $region17: #{tpu_custom_call.1} parent=15 // pred_check
          %p84 = pneg %p33
        $region18: #{tpu_custom_call.1} parent=15 // pred_check_branch
          %86 = sbr.rel (%p84) target = $region20
        $region19: #{tpu_custom_call.1} parent=15 // pred_region
          %s87 = sand.u32 %s23, 1
          %s88 = scalar_lea.sflag [#allocation3], %s87
          %s89 = sand.u32 %s23, 1
          %s90 = smul.addr %s89, 8
          %s91 = scalar_lea.vmem [#allocation2], %s90
          %s93 = ssub.s32 128, 128
          %94 = vsyncadd %s88, %s93
          %s95 = smul.addr %s13, 128
          %s96 = scalar_lea.hbm %s0, %s95
          %s98 = sshll.u32 %s91, 4
          %s99 = int_to_ptr.vmem [resolvable:$true] %s98
          %101 = dma.hbm_to_vmem [thread:$0]  %s96, 128, %s99, %s88
        $region20: #{tpu_custom_call.1} parent=15 // pred_fallthru
          _
      $region16: #{tpu_custom_call.1} parent=5 // pred_fallthru
        _
      %p102 = scmp.le.s32.totalorder 1, %s13
      %p103 = scmp.lt.s32.totalorder %s13, 3
      %p104 = pnand %p102, %p103
      %p105 = pneg %p104
      // Predicated region
      $region21: #{tpu_custom_call.1} parent=5 // pred_check
        _
      $region22: #{tpu_custom_call.1} parent=5 // pred_check_branch
        %107 = sbr.rel (%p104) target = $region24
      $region23: #{tpu_custom_call.1} parent=5 // pred_region
        %s108 = ssub.s32 %s13, 1
        %s109 = sand.u32 %s26, 1
        %s110 = scalar_lea.sflag [#allocation3], %s109
        %s111 = sand.u32 %s26, 1
        %s112 = smul.addr %s111, 8
        %s113 = scalar_lea.vmem [#allocation2], %s112
        // Predicated region
        $region25: #{tpu_custom_call.1} parent=23 // pred_check
          %p114 = pneg %p39
        $region26: #{tpu_custom_call.1} parent=23 // pred_check_branch
          %116 = sbr.rel (%p114) target = $region28
        $region27: #{tpu_custom_call.1} parent=23 // pred_region
          %117 = dma.done %s110, 128
        $region28: #{tpu_custom_call.1} parent=23 // pred_fallthru
          _
        %s118 = sand.u32 %s26, 1
        %s119 = scalar_lea.sflag [#allocation3], %s118
        %s120 = sand.u32 %s26, 1
        %s121 = smul.addr %s120, 8
        %s122 = scalar_lea.vmem [#allocation2], %s121
        %p123 = pneg %p39
        %p124 = pneg %p36
        %p125 = pneg %p65
        %p126 = pneg %p62
        %s127 = sand.u32 %s52, 1
        %s128 = scalar_lea.sflag [#allocation4], %s127
        %s129 = sand.u32 %s52, 1
        %s130 = smul.addr %s129, 8
        %s131 = scalar_lea.vmem [#allocation5], %s130
        %v132 = vld [vmem:[%s113] sm:$0xff]
        %v133 = vmax.f32 %v132, 0.0
        %v134 = vand.u32 2147483647, %v132
        %v135 = vsub.f32 0.0, %v134
        %v136 = vmul.f32 %v135, 1.442695
        %v137 = vpow.pop %v136
        %v138 = vadd.f32 %v137, 1.0
        %v139 = vlog2.pop %v138
        %v140 = vmul.f32 %v139, 0.6931472
        %v141 = vmul.f32 -0.5, %v137
        %v142 = vadd.f32 %v141, 1.0
        %v143 = vmul.f32 %v142, %v137
        %v144 = vand.u32 2147483647, %v137
        %vm145 = vcmp.lt.f32.partialorder %v144, 0.0004427343
        %v146 = vsel %vm145, %v143, %v140
        %v147 = vadd.f32 %v133, %v146
        %vm148 = vcmp.gt.f32.partialorder %v132, 20.0
        %v149 = vsel %vm148, %v132, %v147
        %v150 = vsub.f32 %v149, 0.6931472
        %151 = vst [vmem:[%s131] sm:$0xff] %v150
        %s152 = sand.u32 %s52, 1
        %s153 = scalar_lea.sflag [#allocation4], %s152
        %s154 = sand.u32 %s52, 1
        %s155 = smul.addr %s154, 8
        %s156 = scalar_lea.vmem [#allocation5], %s155
        // Predicated region
        $region29: #{tpu_custom_call.1} parent=23 // pred_check
          %p157 = pneg %p62
        $region30: #{tpu_custom_call.1} parent=23 // pred_check_branch
          %159 = sbr.rel (%p157) target = $region32
        $region31: #{tpu_custom_call.1} parent=23 // pred_region
          %s161 = ssub.s32 128, 128
          %162 = vsyncadd %s153, %s161
          %s163 = smul.addr %s18, 128
          %s164 = scalar_lea.hbm %s1, %s163
          %s166 = sshll.u32 %s156, 4
          %s167 = int_to_ptr.vmem [resolvable:$true] %s166
          %169 = dma.vmem_to_hbm [thread:$0]  %s167, 128, %s164, %s153
        $region32: #{tpu_custom_call.1} parent=23 // pred_fallthru
          _
      $region24: #{tpu_custom_call.1} parent=5 // pred_fallthru
        _
      %p170 = scmp.le.s32.totalorder 2, %s13
      // Predicated region
      $region33: #{tpu_custom_call.1} parent=5 // pred_check
        %p171 = pneg %p170
      $region34: #{tpu_custom_call.1} parent=5 // pred_check_branch
        %173 = sbr.rel (%p171) target = $region36
      $region35: #{tpu_custom_call.1} parent=5 // pred_region
        %s174 = ssub.s32 %s13, 2
        // Predicated region
        $region37: #{tpu_custom_call.1} parent=35 // pred_check
          %p175 = pneg %p68
        $region38: #{tpu_custom_call.1} parent=35 // pred_check_branch
          %177 = sbr.rel (%p175) target = $region40
        $region39: #{tpu_custom_call.1} parent=35 // pred_region
          %s178 = sand.u32 %s53, 1
          %s179 = scalar_lea.sflag [#allocation4], %s178
          %s180 = sand.u32 %s53, 1
          %s181 = smul.addr %s180, 8
          %s182 = scalar_lea.vmem [#allocation5], %s181
          %183 = dma.done %s179, 128
        $region40: #{tpu_custom_call.1} parent=35 // pred_fallthru
          _
      $region36: #{tpu_custom_call.1} parent=5 // pred_fallthru
        _
    $region6: #{tpu_custom_call.1} parent=1 // loop_footer
      %s17 = sadd.s32 1, %s13
    $region7: #{tpu_custom_call.1} parent=1 // loop_footer_branch
      %12 = sbr.rel target = $region3
    $region8: #{tpu_custom_call.1} parent=1 // loop_exit
      _
    %184 = vsyncpa [#allocation3], 1
    %s185 = scalar_lea.sflag [#allocation3], 1
    %186 = vsyncpa %s185, 1
    %187 = vsyncpa [#allocation4], 1
    %s188 = scalar_lea.sflag [#allocation4], 1
    %189 = vsyncpa %s188, 1

</llo_original>
